<compile_context>
chip_gen: v6e
topology: v6e:2x2x1
jax: 0.10.0
libtpu: 0.0.40
codegen_flags: <defaults>
</compile_context>

<pallas_src>
import functools

import jax
import jax.numpy as jnp
from jax import lax
from jax.experimental import pallas as pl
from jax.experimental.pallas import tpu as pltpu


def _conv_mean_pool_kernel(x_ref, w_ref, b_ref, o_ref, *, k, hp, wp):
    # x_ref: (Nb, 4, Hh, Wh, Cin)   phase-split, pre-padded input
    #        x_ref[n, 2a+b, r, s, c] == x_pad[n, 2r+a, 2s+b, c]
    # w_ref: ((k+1)^2 * Cin, Cpad)  pool-fused stride-2 conv weight, (u,v,c) x cout
    # b_ref: (1, Cpad)              conv bias (zero-padded to Cpad)
    # o_ref: (Nb, Hp, Wp, Cpad)     pooled output (NHWC, lane-dense channel dim)
    nb = x_ref.shape[0]
    cin = x_ref.shape[-1]
    cpad = o_ref.shape[-1]

    xv = x_ref[...].astype(jnp.float32)

    # In-register im2col: for output pixel (I, J) and tap (u, v) we need
    # x_pad[2I+u, 2J+v] == phase (u%2, v%2) at contiguous offset (u//2 + I, v//2 + J).
    cols = []
    for u in range(k + 1):
        a, r0 = u % 2, u // 2
        for v in range(k + 1):
            b, s0 = v % 2, v // 2
            ph = a * 2 + b
            cols.append(xv[:, ph, r0:r0 + hp, s0:s0 + wp, :])   # (Nb, Hp, Wp, Cin)
    patches = jnp.concatenate(cols, axis=-1)                    # (Nb, Hp, Wp, (k+1)^2*Cin)
    patches = patches.reshape(nb * hp * wp, (k + 1) * (k + 1) * cin)

    # Single MXU matmul producing the pooled output directly (f32 accumulation).
    y = jnp.dot(patches, w_ref[...], preferred_element_type=jnp.float32)   # (M, Cpad)
    y = y + b_ref[...]                                                     # broadcast (1, Cpad)
    o_ref[...] = y.reshape(nb, hp, wp, cpad).astype(o_ref.dtype)


def conv_mean_pool(x_nchw, weight, bias, kernel_size):
    """ConvMeanPool.forward.  x: (N, Cin, H, W); weight: (Cout, Cin, k, k); bias: (Cout,)."""
    N, Cin, H, W = x_nchw.shape
    Cout = weight.shape[0]
    k = kernel_size
    p = (k - 1) // 2
    assert k % 2 == 1, "odd kernel_size assumed for 'same' padding"
    assert H % 2 == 0 and W % 2 == 0, "even spatial dims assumed for 2x2 mean pool"
    Hp, Wp = H // 2, W // 2
    Hpad, Wpad = H + 2 * p, W + 2 * p          # both even (H, W even; 2p even)
    Hh, Wh = Hpad // 2, Wpad // 2
    Cpad = ((Cout + 127) // 128) * 128         # lane-dense matmul N dim / output store

    # ---- Fold the 2x2 mean pool into the conv weights (stride-2, (k+1)^2 taps).
    wt = jnp.transpose(weight, (2, 3, 1, 0)).astype(jnp.float32)            # (k, k, Cin, Cout)
    w_eff = 0.25 * (jnp.pad(wt, ((0, 1), (0, 1), (0, 0), (0, 0)))
                    + jnp.pad(wt, ((1, 0), (0, 1), (0, 0), (0, 0)))
                    + jnp.pad(wt, ((0, 1), (1, 0), (0, 0), (0, 0)))
                    + jnp.pad(wt, ((1, 0), (1, 0), (0, 0), (0, 0))))        # (k+1, k+1, Cin, Cout)
    w2 = w_eff.reshape((k + 1) * (k + 1) * Cin, Cout)
    w2 = jnp.pad(w2, ((0, 0), (0, Cpad - Cout)))
    b2 = jnp.pad(bias.astype(jnp.float32), (0, Cpad - Cout)).reshape(1, Cpad)

    # ---- Pre-pad + phase-split the input in the wrapper (layout plumbing only).
    # x_ph[n, 2a+b, r, s, c] == x_pad[n, 2r+a, 2s+b, c]
    x_nhwc = jnp.transpose(x_nchw, (0, 2, 3, 1))
    x_pad = jnp.pad(x_nhwc, ((0, 0), (p, p), (p, p), (0, 0)))
    x_ph = (x_pad.reshape(N, Hh, 2, Wh, 2, Cin)
            .transpose(0, 2, 4, 1, 3, 5)
            .reshape(N, 4, Hh, Wh, Cin))

    # ---- Batch blocking: Nb images per grid step.
    elt = 4
    out_elt = jnp.dtype(x_nchw.dtype).itemsize
    per_img = (2 * (4 * Hh * Wh * Cin * elt)              # double-buffered input block
               + 2 * (Hp * Wp * Cpad * out_elt)           # double-buffered output block
               + Hp * Wp * (k + 1) * (k + 1) * Cin * elt  # in-register im2col
               + Hp * Wp * Cpad * elt)                    # matmul result
    budget = 8 * 1024 * 1024                              # conservative (v7x: 64 MiB physical VMEM)
    cap = max(1, budget // max(per_img, 1))
    cap = min(cap, N)
    if N >= 2:
        cap = min(cap, max(1, N // 2))                    # keep >= 2 grid steps for v7x's 2 TCs
    Nb = 1
    for d in range(1, int(cap) + 1):                      # largest divisor of N within cap
        if N % d == 0:
            Nb = d
    grid = (N // Nb,)

    w_bytes = (k + 1) * (k + 1) * Cin * Cpad * elt
    est = Nb * per_img + 2 * (w_bytes + Cpad * elt)
    vmem_limit = int(min(max(2 * est, 32 * 1024 * 1024), 64 * 1024 * 1024))

    kernel = functools.partial(_conv_mean_pool_kernel, k=k, hp=Hp, wp=Wp)

    out_nhwc = pl.pallas_call(
        kernel,
        out_shape=jax.ShapeDtypeStruct((N, Hp, Wp, Cpad), x_nchw.dtype),
        grid_spec=pltpu.PrefetchScalarGridSpec(
            num_scalar_prefetch=0,
            grid=grid,
            in_specs=[
                pl.BlockSpec((Nb, 4, Hh, Wh, Cin), lambda n: (n, 0, 0, 0, 0)),
                pl.BlockSpec(((k + 1) * (k + 1) * Cin, Cpad), lambda n: (0, 0)),
                pl.BlockSpec((1, Cpad), lambda n: (0, 0)),
            ],
            out_specs=pl.BlockSpec((Nb, Hp, Wp, Cpad), lambda n: (n, 0, 0, 0)),
        ),
        compiler_params=pltpu.CompilerParams(
            dimension_semantics=("parallel",),
            vmem_limit_bytes=vmem_limit,
        ),
    )(x_ph, w2, b2)

    out_nhwc = out_nhwc[..., :Cout]                       # drop Cout lane padding
    return jnp.transpose(out_nhwc, (0, 3, 1, 2))          # NHWC -> NCHW


def _reference(x_nchw, weight, bias, kernel_size):
    """Pure-JAX reference matching the PyTorch ConvMeanPool module."""
    p = (kernel_size - 1) // 2
    y = lax.conv_general_dilated(
        x_nchw, weight, window_strides=(1, 1), padding=[(p, p), (p, p)],
        dimension_numbers=("NCHW", "OIHW", "NCHW"))
    y = y + bias[None, :, None, None]
    return (y[:, :, ::2, ::2] + y[:, :, 1::2, ::2]
            + y[:, :, ::2, 1::2] + y[:, :, 1::2, 1::2]) / 4.0


if __name__ == "__main__":
    N, Cin, Cout, H, W, K = 2, 4, 8, 16, 16, 3

    key = jax.random.PRNGKey(0)
    kx, kw, kb = jax.random.split(key, 3)
    x = jax.random.normal(kx, (N, Cin, H, W), dtype=jnp.float32)
    # Deterministic synthetic parameters (Conv2d(Cin, Cout, K) shapes).
    weight = jax.random.normal(kw, (Cout, Cin, K, K), dtype=jnp.float32) * 0.1
    bias = jax.random.normal(kb, (Cout,), dtype=jnp.float32) * 0.1

    out = conv_mean_pool(x, weight, bias, K)
    out = jax.block_until_ready(out)

    ref = _reference(x, weight, bias, K)
    assert out.shape == (N, Cout, H // 2, W // 2), out.shape
    assert jnp.allclose(out, ref, atol=1e-4, rtol=1e-4), float(jnp.max(jnp.abs(out - ref)))

    print("KERNEL_OK")
</pallas_src>

<mosaic_0001>
module attributes {stable_mosaic.version = 11 : i64} {
  func.func @_conv_mean_pool_kernel(%arg0: i32, %arg1: memref<1x4x9x9x4xf32, #tpu.memory_space<vmem>>, %arg2: memref<64x128xf32, #tpu.memory_space<vmem>>, %arg3: memref<1x128xf32, #tpu.memory_space<vmem>>, %arg4: memref<1x8x8x128xf32, #tpu.memory_space<vmem>>) attributes {dimension_semantics = [#tpu.dimension_semantics<parallel>], iteration_bounds = array<i64: 2>, scalar_prefetch = 0 : i64, scratch_operands = 0 : i64, tpu.core_type = #tpu.core_type<tc>, window_params = [{transform_indices = @transform_0, window_bounds = array<i64: 1, 4, 9, 9, 4>}, {pipeline_mode = #tpu.pipeline_mode<synchronous>, transform_indices = @transform_1, window_bounds = array<i64: 64, 128>}, {pipeline_mode = #tpu.pipeline_mode<synchronous>, transform_indices = @transform_2, window_bounds = array<i64: 1, 128>}, {transform_indices = @transform_3, window_bounds = array<i64: 1, 8, 8, 128>}]} {
    %c0 = arith.constant 0 : index
    %c0_0 = arith.constant 0 : index
    %c0_1 = arith.constant 0 : index
    %c0_2 = arith.constant 0 : index
    %c0_3 = arith.constant 0 : index
    %0 = vector.load %arg1[%c0, %c0_0, %c0_1, %c0_2, %c0_3] : memref<1x4x9x9x4xf32, #tpu.memory_space<vmem>>, vector<1x4x9x9x4xf32>
    %1 = vector.extract_strided_slice %0 {offsets = [0, 0, 0, 0, 0], sizes = [1, 1, 8, 8, 4], strides = [1, 1, 1, 1, 1]} : vector<1x4x9x9x4xf32> to vector<1x1x8x8x4xf32>
    %2 = vector.shape_cast %1 : vector<1x1x8x8x4xf32> to vector<1x8x8x4xf32>
    %3 = vector.extract_strided_slice %0 {offsets = [0, 1, 0, 0, 0], sizes = [1, 1, 8, 8, 4], strides = [1, 1, 1, 1, 1]} : vector<1x4x9x9x4xf32> to vector<1x1x8x8x4xf32>
    %4 = vector.shape_cast %3 : vector<1x1x8x8x4xf32> to vector<1x8x8x4xf32>
    %5 = vector.extract_strided_slice %0 {offsets = [0, 0, 0, 1, 0], sizes = [1, 1, 8, 8, 4], strides = [1, 1, 1, 1, 1]} : vector<1x4x9x9x4xf32> to vector<1x1x8x8x4xf32>
    %6 = vector.shape_cast %5 : vector<1x1x8x8x4xf32> to vector<1x8x8x4xf32>
    %7 = vector.extract_strided_slice %0 {offsets = [0, 1, 0, 1, 0], sizes = [1, 1, 8, 8, 4], strides = [1, 1, 1, 1, 1]} : vector<1x4x9x9x4xf32> to vector<1x1x8x8x4xf32>
    %8 = vector.shape_cast %7 : vector<1x1x8x8x4xf32> to vector<1x8x8x4xf32>
    %9 = vector.extract_strided_slice %0 {offsets = [0, 2, 0, 0, 0], sizes = [1, 1, 8, 8, 4], strides = [1, 1, 1, 1, 1]} : vector<1x4x9x9x4xf32> to vector<1x1x8x8x4xf32>
    %10 = vector.shape_cast %9 : vector<1x1x8x8x4xf32> to vector<1x8x8x4xf32>
    %11 = vector.extract_strided_slice %0 {offsets = [0, 3, 0, 0, 0], sizes = [1, 1, 8, 8, 4], strides = [1, 1, 1, 1, 1]} : vector<1x4x9x9x4xf32> to vector<1x1x8x8x4xf32>
    %12 = vector.shape_cast %11 : vector<1x1x8x8x4xf32> to vector<1x8x8x4xf32>
    %13 = vector.extract_strided_slice %0 {offsets = [0, 2, 0, 1, 0], sizes = [1, 1, 8, 8, 4], strides = [1, 1, 1, 1, 1]} : vector<1x4x9x9x4xf32> to vector<1x1x8x8x4xf32>
    %14 = vector.shape_cast %13 : vector<1x1x8x8x4xf32> to vector<1x8x8x4xf32>
    %15 = vector.extract_strided_slice %0 {offsets = [0, 3, 0, 1, 0], sizes = [1, 1, 8, 8, 4], strides = [1, 1, 1, 1, 1]} : vector<1x4x9x9x4xf32> to vector<1x1x8x8x4xf32>
    %16 = vector.shape_cast %15 : vector<1x1x8x8x4xf32> to vector<1x8x8x4xf32>
    %17 = vector.extract_strided_slice %0 {offsets = [0, 0, 1, 0, 0], sizes = [1, 1, 8, 8, 4], strides = [1, 1, 1, 1, 1]} : vector<1x4x9x9x4xf32> to vector<1x1x8x8x4xf32>
    %18 = vector.shape_cast %17 : vector<1x1x8x8x4xf32> to vector<1x8x8x4xf32>
    %19 = vector.extract_strided_slice %0 {offsets = [0, 1, 1, 0, 0], sizes = [1, 1, 8, 8, 4], strides = [1, 1, 1, 1, 1]} : vector<1x4x9x9x4xf32> to vector<1x1x8x8x4xf32>
    %20 = vector.shape_cast %19 : vector<1x1x8x8x4xf32> to vector<1x8x8x4xf32>
    %21 = vector.extract_strided_slice %0 {offsets = [0, 0, 1, 1, 0], sizes = [1, 1, 8, 8, 4], strides = [1, 1, 1, 1, 1]} : vector<1x4x9x9x4xf32> to vector<1x1x8x8x4xf32>
    %22 = vector.shape_cast %21 : vector<1x1x8x8x4xf32> to vector<1x8x8x4xf32>
    %23 = vector.extract_strided_slice %0 {offsets = [0, 1, 1, 1, 0], sizes = [1, 1, 8, 8, 4], strides = [1, 1, 1, 1, 1]} : vector<1x4x9x9x4xf32> to vector<1x1x8x8x4xf32>
    %24 = vector.shape_cast %23 : vector<1x1x8x8x4xf32> to vector<1x8x8x4xf32>
    %25 = vector.extract_strided_slice %0 {offsets = [0, 2, 1, 0, 0], sizes = [1, 1, 8, 8, 4], strides = [1, 1, 1, 1, 1]} : vector<1x4x9x9x4xf32> to vector<1x1x8x8x4xf32>
    %26 = vector.shape_cast %25 : vector<1x1x8x8x4xf32> to vector<1x8x8x4xf32>
    %27 = vector.extract_strided_slice %0 {offsets = [0, 3, 1, 0, 0], sizes = [1, 1, 8, 8, 4], strides = [1, 1, 1, 1, 1]} : vector<1x4x9x9x4xf32> to vector<1x1x8x8x4xf32>
    %28 = vector.shape_cast %27 : vector<1x1x8x8x4xf32> to vector<1x8x8x4xf32>
    %29 = vector.extract_strided_slice %0 {offsets = [0, 2, 1, 1, 0], sizes = [1, 1, 8, 8, 4], strides = [1, 1, 1, 1, 1]} : vector<1x4x9x9x4xf32> to vector<1x1x8x8x4xf32>
    %30 = vector.shape_cast %29 : vector<1x1x8x8x4xf32> to vector<1x8x8x4xf32>
    %31 = vector.extract_strided_slice %0 {offsets = [0, 3, 1, 1, 0], sizes = [1, 1, 8, 8, 4], strides = [1, 1, 1, 1, 1]} : vector<1x4x9x9x4xf32> to vector<1x1x8x8x4xf32>
    %32 = vector.shape_cast %31 : vector<1x1x8x8x4xf32> to vector<1x8x8x4xf32>
    %33 = tpu.concatenate %2, %4, %6, %8, %10, %12, %14, %16, %18, %20, %22, %24, %26, %28, %30, %32 in 3 : vector<1x8x8x4xf32>, vector<1x8x8x4xf32>, vector<1x8x8x4xf32>, vector<1x8x8x4xf32>, vector<1x8x8x4xf32>, vector<1x8x8x4xf32>, vector<1x8x8x4xf32>, vector<1x8x8x4xf32>, vector<1x8x8x4xf32>, vector<1x8x8x4xf32>, vector<1x8x8x4xf32>, vector<1x8x8x4xf32>, vector<1x8x8x4xf32>, vector<1x8x8x4xf32>, vector<1x8x8x4xf32>, vector<1x8x8x4xf32> -> vector<1x8x8x64xf32>
    %34 = vector.shape_cast %33 : vector<1x8x8x64xf32> to vector<64x64xf32>
    %c0_4 = arith.constant 0 : index
    %c0_5 = arith.constant 0 : index
    %35 = vector.load %arg2[%c0_4, %c0_5] : memref<64x128xf32, #tpu.memory_space<vmem>>, vector<64x128xf32>
    %cst = arith.constant dense<0.000000e+00> : vector<64x128xf32>
    %36 = tpu.matmul %34, %35, %cst {dimension_numbers = #tpu.dot_dimension_numbers<[1], [0], [0], [1], [0, 0, 1, 1], [], []>} : vector<64x64xf32>, vector<64x128xf32>, vector<64x128xf32> -> vector<64x128xf32>
    %c0_6 = arith.constant 0 : index
    %c0_7 = arith.constant 0 : index
    %37 = vector.load %arg3[%c0_6, %c0_7] : memref<1x128xf32, #tpu.memory_space<vmem>>, vector<1x128xf32>
    %38 = vector.broadcast %37 : vector<1x128xf32> to vector<64x128xf32>
    %39 = arith.addf %36, %38 : vector<64x128xf32>
    %40 = vector.shape_cast %39 : vector<64x128xf32> to vector<1x8x8x128xf32>
    %c0_8 = arith.constant 0 : index
    %c0_9 = arith.constant 0 : index
    %c0_10 = arith.constant 0 : index
    %c0_11 = arith.constant 0 : index
    %41 = vector.load %arg4[%c0_8, %c0_9, %c0_10, %c0_11] : memref<1x8x8x128xf32, #tpu.memory_space<vmem>>, vector<1x8x8x128xf32>
    tpu.vector_store %arg4[%c0_8, %c0_9, %c0_10, %c0_11], %40 {strides = array<i32>} : memref<1x8x8x128xf32, #tpu.memory_space<vmem>>, vector<1x8x8x128xf32>,
    return
  }
  func.func @transform_0(%arg0: i32) -> (i32, i32, i32, i32, i32) {
    %c0_i32 = arith.constant 0 : i32
    %c0_i32_0 = arith.constant 0 : i32
    %c0_i32_1 = arith.constant 0 : i32
    %c0_i32_2 = arith.constant 0 : i32
    %c0_i32_3 = arith.constant 0 : i32
    return %arg0, %c0_i32, %c0_i32_0, %c0_i32_1, %c0_i32_2 : i32, i32, i32, i32, i32
  }
  func.func @transform_1(%arg0: i32) -> (i32, i32) {
    %c0_i32 = arith.constant 0 : i32
    %c0_i32_0 = arith.constant 0 : i32
    %c0_i32_1 = arith.constant 0 : i32
    return %c0_i32, %c0_i32_0 : i32, i32
  }
  func.func @transform_2(%arg0: i32) -> (i32, i32) {
    %c0_i32 = arith.constant 0 : i32
    %c0_i32_0 = arith.constant 0 : i32
    %c0_i32_1 = arith.constant 0 : i32
    return %c0_i32, %c0_i32_0 : i32, i32
  }
  func.func @transform_3(%arg0: i32) -> (i32, i32, i32, i32) {
    %c0_i32 = arith.constant 0 : i32
    %c0_i32_0 = arith.constant 0 : i32
    %c0_i32_1 = arith.constant 0 : i32
    %c0_i32_2 = arith.constant 0 : i32
    return %arg0, %c0_i32, %c0_i32_0, %c0_i32_1 : i32, i32, i32, i32
  }
}

</mosaic_0001>

<llo_original>
// kernel: tpu_custom_call.1
$region0: #{tpu_custom_call.1}
  #allocation0 [shape = 'u32[]', space=smem, size = 0x4, offset = 0x4, fixed_abs, tag = 'smem constant byte address 0x4 - core index']
  #allocation1 [shape = 'u32[144,128]{1,0:T(1,128)}', space=vmem, size = 0x12000, scoped, tag = 'internal scratch']
  %s0 = inlined_call_operand.vmem [shape: f32[2,4,9,9,4], index: 0, kind: input, shape index: {}]
  %s1 = inlined_call_operand.vmem [shape: f32[64,128], index: 1, kind: input, shape index: {}]
  %s2 = inlined_call_operand.vmem [shape: f32[1,128], index: 2, kind: input, shape index: {}]
  %s3 = inlined_call_operand.hbm [shape: f32[2,8,8,128], index: 3, kind: output, shape index: {}]
  %s4 = sld [smem:[#allocation0]]
  $region45: #{tpu_custom_call.1} parent=0
    _
  %s6 = ssub.s32 1, %s4
  %s7 = scalar_select 0, %s6, %s4
  $region1: #{tpu_custom_call.1} parent=0
    #allocation2 [shape = 'u8[65536]{0}', space=vmem, size = 0x10000, scoped, tag = 'output window, operand 0']
    #allocation3 [shape = 's32[2]{0}', space=sflag, size = 0x8, scoped, tag = 'scoped memory for tpu_custom_call.1']
    %8 = vsyncpa [#allocation3], 0
    %s9 = scalar_lea.sflag [#allocation3], 1
    %10 = vsyncpa %s9, 0
    loop: start=0, step=1, limit=4
    $region2: #{tpu_custom_call.1} parent=1 // loop_pre_header
      _
    $region3: #{tpu_custom_call.1} parent=1 // loop_header
      %s12 = sphi 0, %s16
      %p13 = scmp.ge.s32.totalorder %s12, 4
      %s22 = sphi 0, %s24
      %s25 = sphi 0, %s22
      %s26 = sphi 0, %s25
      %s42 = sphi 0, %s26
      %s46 = sphi 0, %s46
      %s48 = sphi 0, %s46
      %s49 = sphi 0, %s48
      %s63 = sphi 0, %s49
      %s67 = sphi 0, %s67
      %s69 = sphi 0, %s67
      %s70 = sphi 0, %s69
      %s84 = sphi 0, %s70
      %s90 = sphi 0, %s92
      %s93 = sphi 0, %s90
      %s94 = sphi 0, %s93
      %s110 = sphi 0, %s94
    $region4: #{tpu_custom_call.1} parent=1 // loop_header_branch
      %15 = sbr.rel (%p13) target = $region8
    $region5: #{tpu_custom_call.1} parent=1 // loop_body
      %s17 = ssub.s32 %s12, 1
      %s18 = ssub.s32 %s12, 2
      %s19 = sadd.s32 %s12, 1
      %s20 = ssub.s32 %s12, %s19
      %p21 = scmp.eq.s32.totalorder %s20, 0
      %s23 = sadd.s32 %s22, 1
      %s24 = scalar_select %p21, %s22, %s23
      %p27 = pneg %p21
      %p28 = scmp.eq.s32.totalorder %s12, 1
      %p29 = por %p27, %p28
      %p30 = scmp.ne.s32.totalorder %s22, %s25
      %p31 = scmp.eq.s32.totalorder %s12, 0
      %p32 = por %p30, %p31
      %p33 = scmp.ne.s32.totalorder %s22, %s25
      %p34 = scmp.eq.s32.totalorder %s17, 1
      %p35 = por %p33, %p34
      %p36 = scmp.ne.s32.totalorder %s25, %s26
      %p37 = scmp.eq.s32.totalorder %s17, 0
      %p38 = por %p36, %p37
      %p39 = scmp.ne.s32.totalorder %s25, %s26
      %p40 = scmp.eq.s32.totalorder %s18, 1
      %p41 = por %p39, %p40
      %p43 = scmp.ne.s32.totalorder %s26, %s42
      %p44 = scmp.eq.s32.totalorder %s18, 0
      %p45 = por %p43, %p44
      %s47 = sadd.s32 %s46, 1
      %p50 = scmp.eq.s32.totalorder %s12, 1
      %p51 = scmp.ne.s32.totalorder %s46, %s48
      %p52 = scmp.eq.s32.totalorder %s12, 0
      %p53 = por %p51, %p52
      %p54 = scmp.ne.s32.totalorder %s46, %s48
      %p55 = scmp.eq.s32.totalorder %s17, 1
      %p56 = por %p54, %p55
      %p57 = scmp.ne.s32.totalorder %s48, %s49
      %p58 = scmp.eq.s32.totalorder %s17, 0
      %p59 = por %p57, %p58
      %p60 = scmp.ne.s32.totalorder %s48, %s49
      %p61 = scmp.eq.s32.totalorder %s18, 1
      %p62 = por %p60, %p61
      %p64 = scmp.ne.s32.totalorder %s49, %s63
      %p65 = scmp.eq.s32.totalorder %s18, 0
      %p66 = por %p64, %p65
      %s68 = sadd.s32 %s67, 1
      %p71 = scmp.eq.s32.totalorder %s12, 1
      %p72 = scmp.ne.s32.totalorder %s67, %s69
      %p73 = scmp.eq.s32.totalorder %s12, 0
      %p74 = por %p72, %p73
      %p75 = scmp.ne.s32.totalorder %s67, %s69
      %p76 = scmp.eq.s32.totalorder %s17, 1
      %p77 = por %p75, %p76
      %p78 = scmp.ne.s32.totalorder %s69, %s70
      %p79 = scmp.eq.s32.totalorder %s17, 0
      %p80 = por %p78, %p79
      %p81 = scmp.ne.s32.totalorder %s69, %s70
      %p82 = scmp.eq.s32.totalorder %s18, 1
      %p83 = por %p81, %p82
      %p85 = scmp.ne.s32.totalorder %s70, %s84
      %p86 = scmp.eq.s32.totalorder %s18, 0
      %p87 = por %p85, %p86
      %s88 = ssub.s32 %s12, %s19
      %p89 = scmp.eq.s32.totalorder %s88, 0
      %s91 = sadd.s32 %s90, 1
      %s92 = scalar_select %p89, %s90, %s91
      %p95 = pneg %p89
      %p96 = scmp.eq.s32.totalorder %s12, 1
      %p97 = por %p95, %p96
      %p98 = scmp.ne.s32.totalorder %s90, %s93
      %p99 = scmp.eq.s32.totalorder %s12, 0
      %p100 = por %p98, %p99
      %p101 = scmp.ne.s32.totalorder %s90, %s93
      %p102 = scmp.eq.s32.totalorder %s17, 1
      %p103 = por %p101, %p102
      %p104 = scmp.ne.s32.totalorder %s93, %s94
      %p105 = scmp.eq.s32.totalorder %s17, 0
      %p106 = por %p104, %p105
      %p107 = scmp.ne.s32.totalorder %s93, %s94
      %p108 = scmp.eq.s32.totalorder %s18, 1
      %p109 = por %p107, %p108
      %p111 = scmp.ne.s32.totalorder %s94, %s110
      %p112 = scmp.eq.s32.totalorder %s18, 0
      %p113 = por %p111, %p112
      %p114 = scmp.le.s32.totalorder 1, %s12
      %p115 = scmp.lt.s32.totalorder %s12, 3
      %p116 = pnand %p114, %p115
      %p117 = pneg %p116
      // Predicated region
      $region9: #{tpu_custom_call.1} parent=5 // pred_check
        _
      $region10: #{tpu_custom_call.1} parent=5 // pred_check_branch
        %119 = sbr.rel (%p116) target = $region12
      $region11: #{tpu_custom_call.1} parent=5 // pred_region
        %s120 = ssub.s32 %s12, 1
        // Predicated region
        $region13: #{tpu_custom_call.1} parent=11 // pred_check
          %p121 = pneg %p59
        $region14: #{tpu_custom_call.1} parent=11 // pred_check_branch
          %123 = sbr.rel (%p121) target = $region16
        $region15: #{tpu_custom_call.1} parent=11 // pred_region
          _
        $region16: #{tpu_custom_call.1} parent=11 // pred_fallthru
          _
        // Predicated region
        $region17: #{tpu_custom_call.1} parent=11 // pred_check
          %p124 = pneg %p80
        $region18: #{tpu_custom_call.1} parent=11 // pred_check_branch
          %126 = sbr.rel (%p124) target = $region20
        $region19: #{tpu_custom_call.1} parent=11 // pred_region
          _
        $region20: #{tpu_custom_call.1} parent=11 // pred_fallthru
          _
      $region12: #{tpu_custom_call.1} parent=5 // pred_fallthru
        _
      %p127 = scmp.lt.s32.totalorder %s12, 2
      // Predicated region
      $region21: #{tpu_custom_call.1} parent=5 // pred_check
        %p128 = pneg %p127
      $region22: #{tpu_custom_call.1} parent=5 // pred_check_branch
        %130 = sbr.rel (%p128) target = $region24
      $region23: #{tpu_custom_call.1} parent=5 // pred_region
        // Predicated region
        $region25: #{tpu_custom_call.1} parent=23 // pred_check
          %p131 = pneg %p32
        $region26: #{tpu_custom_call.1} parent=23 // pred_check_branch
          %133 = sbr.rel (%p131) target = $region28
        $region27: #{tpu_custom_call.1} parent=23 // pred_region
          %p134 = scmp.lt.s32.totalorder %s12, 1
          %s135 = scalar_select %p134, %s12, 1
          %s136 = smul.addr %s135, 72
          %s137 = smul.addr %s136, 8
          %s138 = scalar_lea.vmem %s0, %s137
        $region28: #{tpu_custom_call.1} parent=23 // pred_fallthru
          _
      $region24: #{tpu_custom_call.1} parent=5 // pred_fallthru
        _
      %p139 = scmp.le.s32.totalorder 1, %s12
      %p140 = scmp.lt.s32.totalorder %s12, 3
      %p141 = pnand %p139, %p140
      %p142 = pneg %p141
      // Predicated region
      $region29: #{tpu_custom_call.1} parent=5 // pred_check
        _
      $region30: #{tpu_custom_call.1} parent=5 // pred_check_branch
        %144 = sbr.rel (%p141) target = $region32
      $region31: #{tpu_custom_call.1} parent=5 // pred_region
        %s145 = ssub.s32 %s12, 1
        %p146 = scmp.lt.s32.totalorder %s17, 1
        %s147 = scalar_select %p146, %s17, 1
        %s148 = smul.addr %s147, 72
        %s149 = smul.addr %s148, 8
        %s150 = scalar_lea.vmem %s0, %s149
        %p151 = pneg %p38
        %p152 = pneg %p35
        %p153 = pneg %p59
        %p154 = pneg %p56
        %p155 = pneg %p80
        %p156 = pneg %p77
        %p157 = pneg %p106
        %p158 = pneg %p103
        %s159 = sand.u32 %s93, 1
        %s160 = scalar_lea.sflag [#allocation3], %s159
        %s161 = sand.u32 %s93, 1
        %s162 = smul.addr %s161, 64
        %s163 = scalar_lea.vmem [#allocation2], %s162
        %p164 = scmp.lt.s32.totalorder %s17, 1
        %s165 = scalar_select %p164, %s17, 1
        %s166 = smul.addr %s165, 72
        %s167 = smul.addr %s166, 8
        %s168 = scalar_lea.vmem %s0, %s167
        %v169 = vld [vmem:[%s168] sm:$0xff]
        %v170 = vld [vmem:[%s168 + $0x8] sm:$0x1]
        %v171 = vld [vmem:[%s168 + $0x10] sm:$0xff]
        %v172 = vld [vmem:[%s168 + $0x18] sm:$0x1]
        %v173 = vld [vmem:[%s168 + $0x20] sm:$0xff]
        %v174 = vld [vmem:[%s168 + $0x28] sm:$0x1]
        %v175 = vld [vmem:[%s168 + $0x30] sm:$0xff]
        %v176 = vld [vmem:[%s168 + $0x38] sm:$0x1]
        %v177 = vld [vmem:[%s168 + $0x40] sm:$0xff]
        %v178 = vld [vmem:[%s168 + $0x48] sm:$0x1]
        %v179 = vld [vmem:[%s168 + $0x50] sm:$0xff]
        %v180 = vld [vmem:[%s168 + $0x58] sm:$0x1]
        %v181 = vld [vmem:[%s168 + $0x60] sm:$0xff]
        %v182 = vld [vmem:[%s168 + $0x68] sm:$0x1]
        %v183 = vld [vmem:[%s168 + $0x70] sm:$0xff]
        %v184 = vld [vmem:[%s168 + $0x78] sm:$0x1]
        %v185 = vld [vmem:[%s168 + $0x80] sm:$0xff]
        %v186 = vld [vmem:[%s168 + $0x88] sm:$0x1]
        %v187 = vld [vmem:[%s168 + $0x90] sm:$0xff]
        %v188 = vld [vmem:[%s168 + $0x98] sm:$0x1]
        %v189 = vld [vmem:[%s168 + $0xa0] sm:$0xff]
        %v190 = vld [vmem:[%s168 + $0xa8] sm:$0x1]
        %v191 = vld [vmem:[%s168 + $0xb0] sm:$0xff]
        %v192 = vld [vmem:[%s168 + $0xb8] sm:$0x1]
        %v193 = vld [vmem:[%s168 + $0xc0] sm:$0xff]
        %v194 = vld [vmem:[%s168 + $0xc8] sm:$0x1]
        %v195 = vld [vmem:[%s168 + $0xd0] sm:$0xff]
        %v196 = vld [vmem:[%s168 + $0xd8] sm:$0x1]
        %v197 = vld [vmem:[%s168 + $0xe0] sm:$0xff]
        %v198 = vld [vmem:[%s168 + $0xe8] sm:$0x1]
        %v199 = vld [vmem:[%s168 + $0xf0] sm:$0xff]
        %v200 = vld [vmem:[%s168 + $0xf8] sm:$0x1]
        %v201 = vld [vmem:[%s168 + $0x100] sm:$0xff]
        %v202 = vld [vmem:[%s168 + $0x108] sm:$0x1]
        %v203 = vld [vmem:[%s168 + $0x110] sm:$0xff]
        %v204 = vld [vmem:[%s168 + $0x118] sm:$0x1]
        %v205 = vld [vmem:[%s168 + $0x120] sm:$0xff]
        %v206 = vld [vmem:[%s168 + $0x128] sm:$0x1]
        %v207 = vld [vmem:[%s168 + $0x130] sm:$0xff]
        %v208 = vld [vmem:[%s168 + $0x138] sm:$0x1]
        %v209 = vld [vmem:[%s168 + $0x140] sm:$0xff]
        %v210 = vld [vmem:[%s168 + $0x148] sm:$0x1]
        %v211 = vld [vmem:[%s168 + $0x150] sm:$0xff]
        %v212 = vld [vmem:[%s168 + $0x158] sm:$0x1]
        %v213 = vld [vmem:[%s168 + $0x160] sm:$0xff]
        %v214 = vld [vmem:[%s168 + $0x168] sm:$0x1]
        %v215 = vld [vmem:[%s168 + $0x170] sm:$0xff]
        %v216 = vld [vmem:[%s168 + $0x178] sm:$0x1]
        %v217 = vld [vmem:[%s168 + $0x180] sm:$0xff]
        %v218 = vld [vmem:[%s168 + $0x188] sm:$0x1]
        %v219 = vld [vmem:[%s168 + $0x190] sm:$0xff]
        %v220 = vld [vmem:[%s168 + $0x198] sm:$0x1]
        %v221 = vld [vmem:[%s168 + $0x1a0] sm:$0xff]
        %v222 = vld [vmem:[%s168 + $0x1a8] sm:$0x1]
        %v223 = vld [vmem:[%s168 + $0x1b0] sm:$0xff]
        %v224 = vld [vmem:[%s168 + $0x1b8] sm:$0x1]
        %v225 = vld [vmem:[%s168 + $0x1c0] sm:$0xff]
        %v226 = vld [vmem:[%s168 + $0x1c8] sm:$0x1]
        %v227 = vld [vmem:[%s168 + $0x1d0] sm:$0xff]
        %v228 = vld [vmem:[%s168 + $0x1d8] sm:$0x1]
        %v229 = vld [vmem:[%s168 + $0x1e0] sm:$0xff]
        %v230 = vld [vmem:[%s168 + $0x1e8] sm:$0x1]
        %v231 = vld [vmem:[%s168 + $0x1f0] sm:$0xff]
        %v232 = vld [vmem:[%s168 + $0x1f8] sm:$0x1]
        %v233 = vld [vmem:[%s168 + $0x200] sm:$0xff]
        %v234 = vld [vmem:[%s168 + $0x208] sm:$0x1]
        %v235 = vld [vmem:[%s168 + $0x210] sm:$0xff]
        %v236 = vld [vmem:[%s168 + $0x218] sm:$0x1]
        %v237 = vld [vmem:[%s168 + $0x220] sm:$0xff]
        %v238 = vld [vmem:[%s168 + $0x228] sm:$0x1]
        %v239 = vld [vmem:[%s168 + $0x230] sm:$0xff]
        %v240 = vld [vmem:[%s168 + $0x238] sm:$0x1]
        %249 = vrot.lane.b32.xlu0 %v187, 4
        %v250 = vpop.permute.xlu0 %249
        %251 = vrot.lane.b32.xlu0 %v189, 4
        %v252 = vpop.permute.xlu0 %251
        %253 = vrot.lane.b32.xlu0 %v191, 4
        %v254 = vpop.permute.xlu0 %253
        %255 = vrot.lane.b32.xlu0 %v193, 4
        %v256 = vpop.permute.xlu0 %255
        %257 = vrot.lane.b32.xlu0 %v195, 4
        %v258 = vpop.permute.xlu0 %257
        %259 = vrot.lane.b32.xlu0 %v197, 4
        %v260 = vpop.permute.xlu0 %259
        %261 = vrot.lane.b32.xlu0 %v199, 4
        %v262 = vpop.permute.xlu0 %261
        %263 = vrot.lane.b32.xlu0 %v201, 4
        %v264 = vpop.permute.xlu0 %263
        %vm289 = vcmask 1046528
        %v290 = vrot.slane %v169, 1
        %v291 = vrot.slane %v170, 1
        %v292 = vsel %vm289, %v290, %v291
        %v293 = vrot.slane %v171, 1
        %v294 = vrot.slane %v172, 1
        %v295 = vsel %vm289, %v293, %v294
        %v296 = vrot.slane %v173, 1
        %v297 = vrot.slane %v174, 1
        %v298 = vsel %vm289, %v296, %v297
        %v299 = vrot.slane %v175, 1
        %v300 = vrot.slane %v176, 1
        %v301 = vsel %vm289, %v299, %v300
        %v302 = vrot.slane %v177, 1
        %v303 = vrot.slane %v178, 1
        %v304 = vsel %vm289, %v302, %v303
        %v305 = vrot.slane %v179, 1
        %v306 = vrot.slane %v180, 1
        %v307 = vsel %vm289, %v305, %v306
        %v308 = vrot.slane %v181, 1
        %v309 = vrot.slane %v182, 1
        %v310 = vsel %vm289, %v308, %v309
        %v311 = vrot.slane %v183, 1
        %v312 = vrot.slane %v184, 1
        %v313 = vsel %vm289, %v311, %v312
        %314 = vrot.lane.b32.xlu0 %v292, 8
        %v315 = vpop.permute.xlu0 %314
        %316 = vrot.lane.b32.xlu0 %v295, 8
        %v317 = vpop.permute.xlu0 %316
        %318 = vrot.lane.b32.xlu0 %v298, 8
        %v319 = vpop.permute.xlu0 %318
        %320 = vrot.lane.b32.xlu0 %v301, 8
        %v321 = vpop.permute.xlu0 %320
        %322 = vrot.lane.b32.xlu0 %v304, 8
        %v323 = vpop.permute.xlu0 %322
        %324 = vrot.lane.b32.xlu0 %v307, 8
        %v325 = vpop.permute.xlu0 %324
        %326 = vrot.lane.b32.xlu0 %v310, 8
        %v327 = vpop.permute.xlu0 %326
        %328 = vrot.lane.b32.xlu0 %v313, 8
        %v329 = vpop.permute.xlu0 %328
        %v346 = vrot.slane %v187, 1
        %v347 = vrot.slane %v188, 1
        %v348 = vsel %vm289, %v346, %v347
        %v349 = vrot.slane %v189, 1
        %v350 = vrot.slane %v190, 1
        %v351 = vsel %vm289, %v349, %v350
        %v352 = vrot.slane %v191, 1
        %v353 = vrot.slane %v192, 1
        %v354 = vsel %vm289, %v352, %v353
        %v355 = vrot.slane %v193, 1
        %v356 = vrot.slane %v194, 1
        %v357 = vsel %vm289, %v355, %v356
        %v358 = vrot.slane %v195, 1
        %v359 = vrot.slane %v196, 1
        %v360 = vsel %vm289, %v358, %v359
        %v361 = vrot.slane %v197, 1
        %v362 = vrot.slane %v198, 1
        %v363 = vsel %vm289, %v361, %v362
        %v364 = vrot.slane %v199, 1
        %v365 = vrot.slane %v200, 1
        %v366 = vsel %vm289, %v364, %v365
        %v367 = vrot.slane %v201, 1
        %v368 = vrot.slane %v202, 1
        %v369 = vsel %vm289, %v367, %v368
        %370 = vrot.lane.b32.xlu0 %v348, 12
        %v371 = vpop.permute.xlu0 %370
        %372 = vrot.lane.b32.xlu0 %v351, 12
        %v373 = vpop.permute.xlu0 %372
        %374 = vrot.lane.b32.xlu0 %v354, 12
        %v375 = vpop.permute.xlu0 %374
        %376 = vrot.lane.b32.xlu0 %v357, 12
        %v377 = vpop.permute.xlu0 %376
        %378 = vrot.lane.b32.xlu0 %v360, 12
        %v379 = vpop.permute.xlu0 %378
        %380 = vrot.lane.b32.xlu0 %v363, 12
        %v381 = vpop.permute.xlu0 %380
        %382 = vrot.lane.b32.xlu0 %v366, 12
        %v383 = vpop.permute.xlu0 %382
        %384 = vrot.lane.b32.xlu0 %v369, 12
        %v385 = vpop.permute.xlu0 %384
        %402 = vrot.lane.b32.xlu0 %v205, 16
        %v403 = vpop.permute.xlu0 %402
        %404 = vrot.lane.b32.xlu0 %v207, 16
        %v405 = vpop.permute.xlu0 %404
        %406 = vrot.lane.b32.xlu0 %v209, 16
        %v407 = vpop.permute.xlu0 %406
        %408 = vrot.lane.b32.xlu0 %v211, 16
        %v409 = vpop.permute.xlu0 %408
        %410 = vrot.lane.b32.xlu0 %v213, 16
        %v411 = vpop.permute.xlu0 %410
        %412 = vrot.lane.b32.xlu0 %v215, 16
        %v413 = vpop.permute.xlu0 %412
        %414 = vrot.lane.b32.xlu0 %v217, 16
        %v415 = vpop.permute.xlu0 %414
        %416 = vrot.lane.b32.xlu0 %v219, 16
        %v417 = vpop.permute.xlu0 %416
        %434 = vrot.lane.b32.xlu0 %v223, 20
        %v435 = vpop.permute.xlu0 %434
        %436 = vrot.lane.b32.xlu0 %v225, 20
        %v437 = vpop.permute.xlu0 %436
        %438 = vrot.lane.b32.xlu0 %v227, 20
        %v439 = vpop.permute.xlu0 %438
        %440 = vrot.lane.b32.xlu0 %v229, 20
        %v441 = vpop.permute.xlu0 %440
        %442 = vrot.lane.b32.xlu0 %v231, 20
        %v443 = vpop.permute.xlu0 %442
        %444 = vrot.lane.b32.xlu0 %v233, 20
        %v445 = vpop.permute.xlu0 %444
        %446 = vrot.lane.b32.xlu0 %v235, 20
        %v447 = vpop.permute.xlu0 %446
        %448 = vrot.lane.b32.xlu0 %v237, 20
        %v449 = vpop.permute.xlu0 %448
        %v466 = vrot.slane %v205, 1
        %v467 = vrot.slane %v206, 1
        %v468 = vsel %vm289, %v466, %v467
        %v469 = vrot.slane %v207, 1
        %v470 = vrot.slane %v208, 1
        %v471 = vsel %vm289, %v469, %v470
        %v472 = vrot.slane %v209, 1
        %v473 = vrot.slane %v210, 1
        %v474 = vsel %vm289, %v472, %v473
        %v475 = vrot.slane %v211, 1
        %v476 = vrot.slane %v212, 1
        %v477 = vsel %vm289, %v475, %v476
        %v478 = vrot.slane %v213, 1
        %v479 = vrot.slane %v214, 1
        %v480 = vsel %vm289, %v478, %v479
        %v481 = vrot.slane %v215, 1
        %v482 = vrot.slane %v216, 1
        %v483 = vsel %vm289, %v481, %v482
        %v484 = vrot.slane %v217, 1
        %v485 = vrot.slane %v218, 1
        %v486 = vsel %vm289, %v484, %v485
        %v487 = vrot.slane %v219, 1
        %v488 = vrot.slane %v220, 1
        %v489 = vsel %vm289, %v487, %v488
        %490 = vrot.lane.b32.xlu0 %v468, 24
        %v491 = vpop.permute.xlu0 %490
        %492 = vrot.lane.b32.xlu0 %v471, 24
        %v493 = vpop.permute.xlu0 %492
        %494 = vrot.lane.b32.xlu0 %v474, 24
        %v495 = vpop.permute.xlu0 %494
        %496 = vrot.lane.b32.xlu0 %v477, 24
        %v497 = vpop.permute.xlu0 %496
        %498 = vrot.lane.b32.xlu0 %v480, 24
        %v499 = vpop.permute.xlu0 %498
        %500 = vrot.lane.b32.xlu0 %v483, 24
        %v501 = vpop.permute.xlu0 %500
        %502 = vrot.lane.b32.xlu0 %v486, 24
        %v503 = vpop.permute.xlu0 %502
        %504 = vrot.lane.b32.xlu0 %v489, 24
        %v505 = vpop.permute.xlu0 %504
        %v522 = vrot.slane %v223, 1
        %v523 = vrot.slane %v224, 1
        %v524 = vsel %vm289, %v522, %v523
        %v525 = vrot.slane %v225, 1
        %v526 = vrot.slane %v226, 1
        %v527 = vsel %vm289, %v525, %v526
        %v528 = vrot.slane %v227, 1
        %v529 = vrot.slane %v228, 1
        %v530 = vsel %vm289, %v528, %v529
        %v531 = vrot.slane %v229, 1
        %v532 = vrot.slane %v230, 1
        %v533 = vsel %vm289, %v531, %v532
        %v534 = vrot.slane %v231, 1
        %v535 = vrot.slane %v232, 1
        %v536 = vsel %vm289, %v534, %v535
        %v537 = vrot.slane %v233, 1
        %v538 = vrot.slane %v234, 1
        %v539 = vsel %vm289, %v537, %v538
        %v540 = vrot.slane %v235, 1
        %v541 = vrot.slane %v236, 1
        %v542 = vsel %vm289, %v540, %v541
        %v543 = vrot.slane %v237, 1
        %v544 = vrot.slane %v238, 1
        %v545 = vsel %vm289, %v543, %v544
        %546 = vrot.lane.b32.xlu0 %v524, 28
        %v547 = vpop.permute.xlu0 %546
        %548 = vrot.lane.b32.xlu0 %v527, 28
        %v549 = vpop.permute.xlu0 %548
        %550 = vrot.lane.b32.xlu0 %v530, 28
        %v551 = vpop.permute.xlu0 %550
        %552 = vrot.lane.b32.xlu0 %v533, 28
        %v553 = vpop.permute.xlu0 %552
        %554 = vrot.lane.b32.xlu0 %v536, 28
        %v555 = vpop.permute.xlu0 %554
        %556 = vrot.lane.b32.xlu0 %v539, 28
        %v557 = vpop.permute.xlu0 %556
        %558 = vrot.lane.b32.xlu0 %v542, 28
        %v559 = vpop.permute.xlu0 %558
        %560 = vrot.lane.b32.xlu0 %v545, 28
        %v561 = vpop.permute.xlu0 %560
        %571 = vrot.lane.b32.xlu0 %v171, 32
        %v572 = vpop.permute.xlu0 %571
        %573 = vrot.lane.b32.xlu0 %v173, 32
        %v574 = vpop.permute.xlu0 %573
        %575 = vrot.lane.b32.xlu0 %v175, 32
        %v576 = vpop.permute.xlu0 %575
        %577 = vrot.lane.b32.xlu0 %v177, 32
        %v578 = vpop.permute.xlu0 %577
        %579 = vrot.lane.b32.xlu0 %v179, 32
        %v580 = vpop.permute.xlu0 %579
        %581 = vrot.lane.b32.xlu0 %v181, 32
        %v582 = vpop.permute.xlu0 %581
        %583 = vrot.lane.b32.xlu0 %v183, 32
        %v584 = vpop.permute.xlu0 %583
        %585 = vrot.lane.b32.xlu0 %v185, 32
        %v586 = vpop.permute.xlu0 %585
        %596 = vrot.lane.b32.xlu0 %v189, 36
        %v597 = vpop.permute.xlu0 %596
        %598 = vrot.lane.b32.xlu0 %v191, 36
        %v599 = vpop.permute.xlu0 %598
        %600 = vrot.lane.b32.xlu0 %v193, 36
        %v601 = vpop.permute.xlu0 %600
        %602 = vrot.lane.b32.xlu0 %v195, 36
        %v603 = vpop.permute.xlu0 %602
        %604 = vrot.lane.b32.xlu0 %v197, 36
        %v605 = vpop.permute.xlu0 %604
        %606 = vrot.lane.b32.xlu0 %v199, 36
        %v607 = vpop.permute.xlu0 %606
        %608 = vrot.lane.b32.xlu0 %v201, 36
        %v609 = vpop.permute.xlu0 %608
        %610 = vrot.lane.b32.xlu0 %v203, 36
        %v611 = vpop.permute.xlu0 %610
        %v621 = vrot.slane %v185, 1
        %v622 = vrot.slane %v186, 1
        %v623 = vsel %vm289, %v621, %v622
        %624 = vrot.lane.b32.xlu0 %v295, 40
        %v625 = vpop.permute.xlu0 %624
        %626 = vrot.lane.b32.xlu0 %v298, 40
        %v627 = vpop.permute.xlu0 %626
        %628 = vrot.lane.b32.xlu0 %v301, 40
        %v629 = vpop.permute.xlu0 %628
        %630 = vrot.lane.b32.xlu0 %v304, 40
        %v631 = vpop.permute.xlu0 %630
        %632 = vrot.lane.b32.xlu0 %v307, 40
        %v633 = vpop.permute.xlu0 %632
        %634 = vrot.lane.b32.xlu0 %v310, 40
        %v635 = vpop.permute.xlu0 %634
        %636 = vrot.lane.b32.xlu0 %v313, 40
        %v637 = vpop.permute.xlu0 %636
        %638 = vrot.lane.b32.xlu0 %v623, 40
        %v639 = vpop.permute.xlu0 %638
        %v649 = vrot.slane %v203, 1
        %v650 = vrot.slane %v204, 1
        %v651 = vsel %vm289, %v649, %v650
        %652 = vrot.lane.b32.xlu0 %v351, 44
        %v653 = vpop.permute.xlu0 %652
        %654 = vrot.lane.b32.xlu0 %v354, 44
        %v655 = vpop.permute.xlu0 %654
        %656 = vrot.lane.b32.xlu0 %v357, 44
        %v657 = vpop.permute.xlu0 %656
        %658 = vrot.lane.b32.xlu0 %v360, 44
        %v659 = vpop.permute.xlu0 %658
        %660 = vrot.lane.b32.xlu0 %v363, 44
        %v661 = vpop.permute.xlu0 %660
        %662 = vrot.lane.b32.xlu0 %v366, 44
        %v663 = vpop.permute.xlu0 %662
        %664 = vrot.lane.b32.xlu0 %v369, 44
        %v665 = vpop.permute.xlu0 %664
        %666 = vrot.lane.b32.xlu0 %v651, 44
        %v667 = vpop.permute.xlu0 %666
        %677 = vrot.lane.b32.xlu0 %v207, 48
        %v678 = vpop.permute.xlu0 %677
        %679 = vrot.lane.b32.xlu0 %v209, 48
        %v680 = vpop.permute.xlu0 %679
        %681 = vrot.lane.b32.xlu0 %v211, 48
        %v682 = vpop.permute.xlu0 %681
        %683 = vrot.lane.b32.xlu0 %v213, 48
        %v684 = vpop.permute.xlu0 %683
        %685 = vrot.lane.b32.xlu0 %v215, 48
        %v686 = vpop.permute.xlu0 %685
        %687 = vrot.lane.b32.xlu0 %v217, 48
        %v688 = vpop.permute.xlu0 %687
        %689 = vrot.lane.b32.xlu0 %v219, 48
        %v690 = vpop.permute.xlu0 %689
        %691 = vrot.lane.b32.xlu0 %v221, 48
        %v692 = vpop.permute.xlu0 %691
        %702 = vrot.lane.b32.xlu0 %v225, 52
        %v703 = vpop.permute.xlu0 %702
        %704 = vrot.lane.b32.xlu0 %v227, 52
        %v705 = vpop.permute.xlu0 %704
        %706 = vrot.lane.b32.xlu0 %v229, 52
        %v707 = vpop.permute.xlu0 %706
        %708 = vrot.lane.b32.xlu0 %v231, 52
        %v709 = vpop.permute.xlu0 %708
        %710 = vrot.lane.b32.xlu0 %v233, 52
        %v711 = vpop.permute.xlu0 %710
        %712 = vrot.lane.b32.xlu0 %v235, 52
        %v713 = vpop.permute.xlu0 %712
        %714 = vrot.lane.b32.xlu0 %v237, 52
        %v715 = vpop.permute.xlu0 %714
        %716 = vrot.lane.b32.xlu0 %v239, 52
        %v717 = vpop.permute.xlu0 %716
        %v727 = vrot.slane %v221, 1
        %v728 = vrot.slane %v222, 1
        %v729 = vsel %vm289, %v727, %v728
        %730 = vrot.lane.b32.xlu0 %v471, 56
        %v731 = vpop.permute.xlu0 %730
        %732 = vrot.lane.b32.xlu0 %v474, 56
        %v733 = vpop.permute.xlu0 %732
        %734 = vrot.lane.b32.xlu0 %v477, 56
        %v735 = vpop.permute.xlu0 %734
        %736 = vrot.lane.b32.xlu0 %v480, 56
        %v737 = vpop.permute.xlu0 %736
        %738 = vrot.lane.b32.xlu0 %v483, 56
        %v739 = vpop.permute.xlu0 %738
        %740 = vrot.lane.b32.xlu0 %v486, 56
        %v741 = vpop.permute.xlu0 %740
        %742 = vrot.lane.b32.xlu0 %v489, 56
        %v743 = vpop.permute.xlu0 %742
        %744 = vrot.lane.b32.xlu0 %v729, 56
        %v745 = vpop.permute.xlu0 %744
        %v755 = vrot.slane %v239, 1
        %v756 = vrot.slane %v240, 1
        %v757 = vsel %vm289, %v755, %v756
        %758 = vrot.lane.b32.xlu0 %v527, 60
        %v759 = vpop.permute.xlu0 %758
        %760 = vrot.lane.b32.xlu0 %v530, 60
        %v761 = vpop.permute.xlu0 %760
        %762 = vrot.lane.b32.xlu0 %v533, 60
        %v763 = vpop.permute.xlu0 %762
        %764 = vrot.lane.b32.xlu0 %v536, 60
        %v765 = vpop.permute.xlu0 %764
        %766 = vrot.lane.b32.xlu0 %v539, 60
        %v767 = vpop.permute.xlu0 %766
        %768 = vrot.lane.b32.xlu0 %v542, 60
        %v769 = vpop.permute.xlu0 %768
        %770 = vrot.lane.b32.xlu0 %v545, 60
        %v771 = vpop.permute.xlu0 %770
        %772 = vrot.lane.b32.xlu0 %v757, 60
        %v773 = vpop.permute.xlu0 %772
        %vm782 = vcmask 31744
        %v783 = vsel %vm782, %v169, %v250
        %v784 = vsel %vm782, %v171, %v252
        %v785 = vsel %vm782, %v173, %v254
        %v786 = vsel %vm782, %v175, %v256
        %v787 = vsel %vm782, %v177, %v258
        %v788 = vsel %vm782, %v179, %v260
        %v789 = vsel %vm782, %v181, %v262
        %v790 = vsel %vm782, %v183, %v264
        %vm791 = vcmask 64512
        %v792 = vsel %vm791, %v783, %v315
        %v793 = vsel %vm791, %v784, %v317
        %v794 = vsel %vm791, %v785, %v319
        %v795 = vsel %vm791, %v786, %v321
        %v796 = vsel %vm791, %v787, %v323
        %v797 = vsel %vm791, %v788, %v325
        %v798 = vsel %vm791, %v789, %v327
        %v799 = vsel %vm791, %v790, %v329
        %vm800 = vcmask 97280
        %v801 = vsel %vm800, %v792, %v371
        %v802 = vsel %vm800, %v793, %v373
        %v803 = vsel %vm800, %v794, %v375
        %v804 = vsel %vm800, %v795, %v377
        %v805 = vsel %vm800, %v796, %v379
        %v806 = vsel %vm800, %v797, %v381
        %v807 = vsel %vm800, %v798, %v383
        %v808 = vsel %vm800, %v799, %v385
        %vm809 = vcmask 130048
        %v810 = vsel %vm809, %v801, %v403
        %v811 = vsel %vm809, %v802, %v405
        %v812 = vsel %vm809, %v803, %v407
        %v813 = vsel %vm809, %v804, %v409
        %v814 = vsel %vm809, %v805, %v411
        %v815 = vsel %vm809, %v806, %v413
        %v816 = vsel %vm809, %v807, %v415
        %v817 = vsel %vm809, %v808, %v417
        %vm818 = vcmask 162816
        %v819 = vsel %vm818, %v810, %v435
        %v820 = vsel %vm818, %v811, %v437
        %v821 = vsel %vm818, %v812, %v439
        %v822 = vsel %vm818, %v813, %v441
        %v823 = vsel %vm818, %v814, %v443
        %v824 = vsel %vm818, %v815, %v445
        %v825 = vsel %vm818, %v816, %v447
        %v826 = vsel %vm818, %v817, %v449
        %vm827 = vcmask 195584
        %v828 = vsel %vm827, %v819, %v491
        %v829 = vsel %vm827, %v820, %v493
        %v830 = vsel %vm827, %v821, %v495
        %v831 = vsel %vm827, %v822, %v497
        %v832 = vsel %vm827, %v823, %v499
        %v833 = vsel %vm827, %v824, %v501
        %v834 = vsel %vm827, %v825, %v503
        %v835 = vsel %vm827, %v826, %v505
        %vm836 = vcmask 228352
        %v837 = vsel %vm836, %v828, %v547
        %v838 = vsel %vm836, %v829, %v549
        %v839 = vsel %vm836, %v830, %v551
        %v840 = vsel %vm836, %v831, %v553
        %v841 = vsel %vm836, %v832, %v555
        %v842 = vsel %vm836, %v833, %v557
        %v843 = vsel %vm836, %v834, %v559
        %v844 = vsel %vm836, %v835, %v561
        %vm845 = vcmask 261120
        %v846 = vsel %vm845, %v837, %v572
        %v847 = vsel %vm845, %v838, %v574
        %v848 = vsel %vm845, %v839, %v576
        %v849 = vsel %vm845, %v840, %v578
        %v850 = vsel %vm845, %v841, %v580
        %v851 = vsel %vm845, %v842, %v582
        %v852 = vsel %vm845, %v843, %v584
        %v853 = vsel %vm845, %v844, %v586
        %vm854 = vcmask 293888
        %v855 = vsel %vm854, %v846, %v597
        %v856 = vsel %vm854, %v847, %v599
        %v857 = vsel %vm854, %v848, %v601
        %v858 = vsel %vm854, %v849, %v603
        %v859 = vsel %vm854, %v850, %v605
        %v860 = vsel %vm854, %v851, %v607
        %v861 = vsel %vm854, %v852, %v609
        %v862 = vsel %vm854, %v853, %v611
        %vm863 = vcmask 326656
        %v864 = vsel %vm863, %v855, %v625
        %v865 = vsel %vm863, %v856, %v627
        %v866 = vsel %vm863, %v857, %v629
        %v867 = vsel %vm863, %v858, %v631
        %v868 = vsel %vm863, %v859, %v633
        %v869 = vsel %vm863, %v860, %v635
        %v870 = vsel %vm863, %v861, %v637
        %v871 = vsel %vm863, %v862, %v639
        %vm872 = vcmask 359424
        %v873 = vsel %vm872, %v864, %v653
        %v874 = vsel %vm872, %v865, %v655
        %v875 = vsel %vm872, %v866, %v657
        %v876 = vsel %vm872, %v867, %v659
        %v877 = vsel %vm872, %v868, %v661
        %v878 = vsel %vm872, %v869, %v663
        %v879 = vsel %vm872, %v870, %v665
        %v880 = vsel %vm872, %v871, %v667
        %vm881 = vcmask 392192
        %v882 = vsel %vm881, %v873, %v678
        %v883 = vsel %vm881, %v874, %v680
        %v884 = vsel %vm881, %v875, %v682
        %v885 = vsel %vm881, %v876, %v684
        %v886 = vsel %vm881, %v877, %v686
        %v887 = vsel %vm881, %v878, %v688
        %v888 = vsel %vm881, %v879, %v690
        %v889 = vsel %vm881, %v880, %v692
        %vm890 = vcmask 424960
        %v891 = vsel %vm890, %v882, %v703
        %v892 = vsel %vm890, %v883, %v705
        %v893 = vsel %vm890, %v884, %v707
        %v894 = vsel %vm890, %v885, %v709
        %v895 = vsel %vm890, %v886, %v711
        %v896 = vsel %vm890, %v887, %v713
        %v897 = vsel %vm890, %v888, %v715
        %v898 = vsel %vm890, %v889, %v717
        %vm899 = vcmask 457728
        %v900 = vsel %vm899, %v891, %v731
        %v901 = vsel %vm899, %v892, %v733
        %v902 = vsel %vm899, %v893, %v735
        %v903 = vsel %vm899, %v894, %v737
        %v904 = vsel %vm899, %v895, %v739
        %v905 = vsel %vm899, %v896, %v741
        %v906 = vsel %vm899, %v897, %v743
        %v907 = vsel %vm899, %v898, %v745
        %vm908 = vcmask 490496
        %v909 = vsel %vm908, %v900, %v759
        %v910 = vsel %vm908, %v901, %v761
        %v911 = vsel %vm908, %v902, %v763
        %v912 = vsel %vm908, %v903, %v765
        %v913 = vsel %vm908, %v904, %v767
        %v914 = vsel %vm908, %v905, %v769
        %v915 = vsel %vm908, %v906, %v771
        %v916 = vsel %vm908, %v907, %v773
        %v917 = vld [vmem:[%s1] sm:$0xff]
        %v918 = vld [vmem:[%s1 + $0x8] sm:$0xff]
        %v919 = vld [vmem:[%s1 + $0x10] sm:$0xff]
        %v920 = vld [vmem:[%s1 + $0x18] sm:$0xff]
        %v921 = vld [vmem:[%s1 + $0x20] sm:$0xff]
        %v922 = vld [vmem:[%s1 + $0x28] sm:$0xff]
        %v923 = vld [vmem:[%s1 + $0x30] sm:$0xff]
        %v924 = vld [vmem:[%s1 + $0x38] sm:$0xff]
        %v925 = vld [vmem:[%s2] sm:$0x1]
        %v927 = vlaneseq
        %v928 = vshrl.u32 %v927, 7
        %v929 = vsub.s32 0, %v928
        %v930 = vrot.slane %v925, %v929
        %vm932 = vcmask 523264
        %v934 = vsel %vm932, %v909, 0
        %v937 = vsel %vm932, %v910, 0
        %v940 = vsel %vm932, %v911, 0
        %v943 = vsel %vm932, %v912, 0
        %v946 = vsel %vm932, %v913, 0
        %v949 = vsel %vm932, %v914, 0
        %v952 = vsel %vm932, %v915, 0
        %v955 = vsel %vm932, %v916, 0
        %957 = vmatprep.subr.mxu0 0.0
        %958 = vmatpush1.msra.mxu0 0.0
        %959 = vmatprep.subr.mxu0 0.0
        %960 = vmatpush1.msra.mxu0 0.0
        %961 = vmatprep.subr.mxu0 0.0
        %962 = vmatpush1.msra.mxu0 0.0
        %963 = vmatprep.subr.mxu0 0.0
        %964 = vmatpush1.msra.mxu0 0.0
        %965 = vmatprep.subr.mxu0 0.0
        %966 = vmatpush1.msra.mxu0 0.0
        %967 = vmatprep.subr.mxu0 0.0
        %968 = vmatpush1.msra.mxu0 0.0
        %969 = vmatprep.subr.mxu0 0.0
        %970 = vmatpush1.msra.mxu0 0.0
        %971 = vmatprep.subr.mxu0 0.0
        %972 = vmatpush1.msra.mxu0 0.0
        %973 = vmatprep.subr.mxu0 0.0
        %974 = vmatpush1.msra.mxu0 %v924
        %975 = vmatprep.subr.mxu0 0.0
        %976 = vmatpush1.msra.mxu0 %v923
        %977 = vmatprep.subr.mxu0 0.0
        %978 = vmatpush1.msra.mxu0 %v922
        %979 = vmatprep.subr.mxu0 0.0
        %980 = vmatpush1.msra.mxu0 %v921
        %981 = vmatprep.subr.mxu0 0.0
        %982 = vmatpush1.msra.mxu0 %v920
        %983 = vmatprep.subr.mxu0 0.0
        %984 = vmatpush1.msra.mxu0 %v919
        %985 = vmatprep.subr.mxu0 0.0
        %986 = vmatpush1.msra.mxu0 %v918
        %987 = vmatprep.subr.mxu0 0.0
        %988 = vmatpush1.msra.mxu0 %v917
        %989 = vmatprep.subr.mxu0 0.0
        %990 = vmatpush2.msra.mxu0 0.0
        %991 = vmatprep.subr.mxu0 0.0
        %992 = vmatpush2.msra.mxu0 0.0
        %993 = vmatprep.subr.mxu0 0.0
        %994 = vmatpush2.msra.mxu0 0.0
        %995 = vmatprep.subr.mxu0 0.0
        %996 = vmatpush2.msra.mxu0 0.0
        %997 = vmatprep.subr.mxu0 0.0
        %998 = vmatpush2.msra.mxu0 0.0
        %999 = vmatprep.subr.mxu0 0.0
        %1000 = vmatpush2.msra.mxu0 0.0
        %1001 = vmatprep.subr.mxu0 0.0
        %1002 = vmatpush2.msra.mxu0 0.0
        %1003 = vmatprep.subr.mxu0 0.0
        %1004 = vmatpush2.msra.mxu0 0.0
        %1005 = vmatprep.subr.mxu0 0.0
        %1006 = vmatpush2.msra.mxu0 0.0
        %1007 = vmatprep.subr.mxu0 0.0
        %1008 = vmatpush2.msra.mxu0 0.0
        %1009 = vmatprep.subr.mxu0 0.0
        %1010 = vmatpush2.msra.mxu0 0.0
        %1011 = vmatprep.subr.mxu0 0.0
        %1012 = vmatpush2.msra.mxu0 0.0
        %1013 = vmatprep.subr.mxu0 0.0
        %1014 = vmatpush2.msra.mxu0 0.0
        %1015 = vmatprep.subr.mxu0 0.0
        %1016 = vmatpush2.msra.mxu0 0.0
        %1017 = vmatprep.subr.mxu0 0.0
        %1018 = vmatpush2.msra.mxu0 0.0
        %1019 = vmatprep.subr.mxu0 0.0
        %1020 = vmatpush2.msra.mxu0 0.0
        %1021 = vmatprep.mubr.f32.mxu0 0.0
        %1022 = vmatmul.mubr.f32.gmra.mxu0 %v934
        %v1023 = vpop.f32.mrf.mxu0
        %v1024 = vadd.f32 %v930, %v1023
        %v1025 = vpop.f32.mrf.mxu0
        %1026 = vmatprep.mubr.f32.mxu0 0.0
        %1027 = vmatmul.mubr.f32.gmra.mxu0 %v937
        %v1028 = vpop.f32.mrf.mxu0
        %v1029 = vadd.f32 %v930, %v1028
        %v1030 = vpop.f32.mrf.mxu0
        %1031 = vmatprep.mubr.f32.mxu0 0.0
        %1032 = vmatmul.mubr.f32.gmra.mxu0 %v940
        %v1033 = vpop.f32.mrf.mxu0
        %v1034 = vadd.f32 %v930, %v1033
        %v1035 = vpop.f32.mrf.mxu0
        %1036 = vmatprep.mubr.f32.mxu0 0.0
        %1037 = vmatmul.mubr.f32.gmra.mxu0 %v943
        %v1038 = vpop.f32.mrf.mxu0
        %v1039 = vadd.f32 %v930, %v1038
        %v1040 = vpop.f32.mrf.mxu0
        %1041 = vmatprep.mubr.f32.mxu0 0.0
        %1042 = vmatmul.mubr.f32.gmra.mxu0 %v946
        %v1043 = vpop.f32.mrf.mxu0
        %v1044 = vadd.f32 %v930, %v1043
        %v1045 = vpop.f32.mrf.mxu0
        %1046 = vmatprep.mubr.f32.mxu0 0.0
        %1047 = vmatmul.mubr.f32.gmra.mxu0 %v949
        %v1048 = vpop.f32.mrf.mxu0
        %v1049 = vadd.f32 %v930, %v1048
        %v1050 = vpop.f32.mrf.mxu0
        %1051 = vmatprep.mubr.f32.mxu0 0.0
        %1052 = vmatmul.mubr.f32.gmra.mxu0 %v952
        %v1053 = vpop.f32.mrf.mxu0
        %v1054 = vadd.f32 %v930, %v1053
        %v1055 = vpop.f32.mrf.mxu0
        %1056 = vmatprep.mubr.f32.mxu0 0.0
        %1057 = vmatmul.mubr.f32.gmra.mxu0 %v955
        %v1058 = vpop.f32.mrf.mxu0
        %v1059 = vadd.f32 %v930, %v1058
        %v1060 = vpop.f32.mrf.mxu0
        %1061 = vdwg.mxu0
        %1062 = vst [vmem:[%s163] sm:$0xff] %v1024
        %1063 = vst [vmem:[%s163 + $0x8] sm:$0xff] %v1029
        %1064 = vst [vmem:[%s163 + $0x10] sm:$0xff] %v1034
        %1065 = vst [vmem:[%s163 + $0x18] sm:$0xff] %v1039
        %1066 = vst [vmem:[%s163 + $0x20] sm:$0xff] %v1044
        %1067 = vst [vmem:[%s163 + $0x28] sm:$0xff] %v1049
        %1068 = vst [vmem:[%s163 + $0x30] sm:$0xff] %v1054
        %1069 = vst [vmem:[%s163 + $0x38] sm:$0xff] %v1059
        %s1070 = sand.u32 %s93, 1
        %s1071 = scalar_lea.sflag [#allocation3], %s1070
        %s1072 = sand.u32 %s93, 1
        %s1073 = smul.addr %s1072, 64
        %s1074 = scalar_lea.vmem [#allocation2], %s1073
        // Predicated region
        $region33: #{tpu_custom_call.1} parent=31 // pred_check
          %p1075 = pneg %p103
        $region34: #{tpu_custom_call.1} parent=31 // pred_check_branch
          %1077 = sbr.rel (%p1075) target = $region36
        $region35: #{tpu_custom_call.1} parent=31 // pred_region
          %s1079 = ssub.s32 1024, 1024
          %1080 = vsyncadd %s1071, %s1079
          %s1081 = smul.addr %s17, 8
          %s1082 = smul.addr %s1081, 128
          %s1083 = scalar_lea.hbm %s3, %s1082
          %s1084 = sshll.u32 %s1074, 4
          %s1085 = int_to_ptr.vmem [resolvable:$true] %s1084
          %1090 = dma.vmem_to_hbm [thread:$0]  %s1085, 1024, %s1083, %s1071, 128, 128, 8
        $region36: #{tpu_custom_call.1} parent=31 // pred_fallthru
          _
      $region32: #{tpu_custom_call.1} parent=5 // pred_fallthru
        _
      %p1091 = scmp.le.s32.totalorder 2, %s12
      // Predicated region
      $region37: #{tpu_custom_call.1} parent=5 // pred_check
        %p1092 = pneg %p1091
      $region38: #{tpu_custom_call.1} parent=5 // pred_check_branch
        %1094 = sbr.rel (%p1092) target = $region40
      $region39: #{tpu_custom_call.1} parent=5 // pred_region
        %s1095 = ssub.s32 %s12, 2
        // Predicated region
        $region41: #{tpu_custom_call.1} parent=39 // pred_check
          %p1096 = pneg %p109
        $region42: #{tpu_custom_call.1} parent=39 // pred_check_branch
          %1098 = sbr.rel (%p1096) target = $region44
        $region43: #{tpu_custom_call.1} parent=39 // pred_region
          %s1099 = sand.u32 %s94, 1
          %s1100 = scalar_lea.sflag [#allocation3], %s1099
          %s1101 = sand.u32 %s94, 1
          %s1102 = smul.addr %s1101, 64
          %s1103 = scalar_lea.vmem [#allocation2], %s1102
          %1104 = dma.done %s1100, 1024
        $region44: #{tpu_custom_call.1} parent=39 // pred_fallthru
          _
      $region40: #{tpu_custom_call.1} parent=5 // pred_fallthru
        _
    $region6: #{tpu_custom_call.1} parent=1 // loop_footer
      %s16 = sadd.s32 1, %s12
    $region7: #{tpu_custom_call.1} parent=1 // loop_footer_branch
      %11 = sbr.rel target = $region3
    $region8: #{tpu_custom_call.1} parent=1 // loop_exit
      _
    %1105 = vsyncpa [#allocation3], 1
    %s1106 = scalar_lea.sflag [#allocation3], 1
    %1107 = vsyncpa %s1106, 1

</llo_original>
